<compile_context>
chip_gen: v7x
topology: tpu7x:2x2x1
jax: 0.10.0
libtpu: 0.0.40
codegen_flags: <defaults>
</compile_context>

<pallas_src>
import jax
import jax.numpy as jnp
from jax import lax
from jax.experimental import pallas as pl
from jax.experimental.pallas import tpu as pltpu

_VMEM_LIMIT = 48 * 1024 * 1024  # fits v7x (64 MiB physical) with headroom


def _pick_tile(n: int) -> int:
    for t in (512, 256, 128):
        if n % t == 0:
            return t
    raise ValueError(f"N={n} must be a multiple of 128")


# ---------------------------------------------------------------------------
# Kernel 1: T = dist_y @ Q   (tiled batched matmul)
# ---------------------------------------------------------------------------
def _bmm_kernel(dy_ref, q_ref, t_ref, acc_ref):
    k = pl.program_id(3)

    @pl.when(k == 0)
    def _():
        acc_ref[...] = jnp.zeros_like(acc_ref)

    acc_ref[...] += jnp.dot(
        dy_ref[0], q_ref[0], preferred_element_type=jnp.float32
    )

    @pl.when(k == pl.num_programs(3) - 1)
    def _():
        t_ref[0] = acc_ref[...].astype(t_ref.dtype)


def _bmm_dy_q(dy, q, tile):
    B, N, _ = dy.shape
    tm = tn = tk = tile
    grid = (B, N // tm, N // tn, N // tk)
    return pl.pallas_call(
        _bmm_kernel,
        out_shape=jax.ShapeDtypeStruct((B, N, N), jnp.float32),
        grid_spec=pltpu.PrefetchScalarGridSpec(
            num_scalar_prefetch=0,
            grid=grid,
            in_specs=[
                pl.BlockSpec((1, tm, tk), lambda b, i, j, k: (b, i, k)),  # dist_y
                pl.BlockSpec((1, tk, tn), lambda b, i, j, k: (b, k, j)),  # Q
            ],
            out_specs=pl.BlockSpec((1, tm, tn), lambda b, i, j, k: (b, i, j)),
            scratch_shapes=[pltpu.VMEM((tm, tn), jnp.float32)],
        ),
        compiler_params=pltpu.CompilerParams(
            dimension_semantics=("parallel", "parallel", "parallel", "arbitrary"),
            vmem_limit_bytes=_VMEM_LIMIT,
        ),
        cost_estimate=pl.CostEstimate(
            flops=2 * B * N * N * N,
            transcendentals=0,
            bytes_accessed=3 * B * N * N * 4,
        ),
    )(dy, q)


# ---------------------------------------------------------------------------
# Kernel 2: per-tile SSE of (dist_x - Q^T @ T)
# ---------------------------------------------------------------------------
def _sse_kernel(q_ref, t_ref, dx_ref, o_ref, acc_ref):
    k = pl.program_id(3)

    @pl.when(k == 0)
    def _():
        acc_ref[...] = jnp.zeros_like(acc_ref)

    # P_tile += contraction over Q's first axis (== Q^T @ T), no .T materialized.
    acc_ref[...] += lax.dot_general(
        q_ref[0],
        t_ref[0],
        dimension_numbers=(((0,), (0,)), ((), ())),
        preferred_element_type=jnp.float32,
    )

    @pl.when(k == pl.num_programs(3) - 1)
    def _():
        diff = dx_ref[0] - acc_ref[...]
        sq = diff * diff
        tm, tn = sq.shape
        # Lane-dense (8, tn) partial sums: fold sublane groups with plain vreg
        # adds (no cross-lane reduction, unmasked full-block store).
        o_ref[0] = jnp.sum(sq.reshape(tm // 8, 8, tn), axis=0)


def _sse_partials(q, t, dx, tile):
    B, N, _ = q.shape
    tm = tn = tk = tile
    gi = N // tm
    grid = (B, gi, N // tn, N // tk)
    return pl.pallas_call(
        _sse_kernel,
        out_shape=jax.ShapeDtypeStruct((B, gi * 8, N), jnp.float32),
        grid_spec=pltpu.PrefetchScalarGridSpec(
            num_scalar_prefetch=0,
            grid=grid,
            in_specs=[
                pl.BlockSpec((1, tk, tm), lambda b, i, j, k: (b, k, i)),  # Q
                pl.BlockSpec((1, tk, tn), lambda b, i, j, k: (b, k, j)),  # T
                pl.BlockSpec((1, tm, tn), lambda b, i, j, k: (b, i, j)),  # dist_x
            ],
            out_specs=pl.BlockSpec((1, 8, tn), lambda b, i, j, k: (b, i, j)),
            scratch_shapes=[pltpu.VMEM((tm, tn), jnp.float32)],
        ),
        compiler_params=pltpu.CompilerParams(
            dimension_semantics=("parallel", "parallel", "parallel", "arbitrary"),
            vmem_limit_bytes=_VMEM_LIMIT,
        ),
        cost_estimate=pl.CostEstimate(
            flops=2 * B * N * N * N + 3 * B * N * N,
            transcendentals=0,
            bytes_accessed=3 * B * N * N * 4 + B * gi * 8 * N * 4,
        ),
    )(q, t, dx)


# ---------------------------------------------------------------------------
# Public wrapper
# ---------------------------------------------------------------------------
def geodesic_loss(Q, dist_x, dist_y, tile=None):
    """Pallas implementation of GeodesicLoss.forward.

    Q, dist_x, dist_y: (B, N, N) float32. Returns a scalar float32 loss.
    """
    B, N, _ = Q.shape
    assert Q.shape == dist_x.shape == dist_y.shape == (B, N, N)
    if tile is None:
        tile = _pick_tile(N)
    assert N % tile == 0 and tile % 128 == 0

    Q = Q.astype(jnp.float32)
    dist_x = dist_x.astype(jnp.float32)
    dist_y = dist_y.astype(jnp.float32)

    t = _bmm_dy_q(dist_y, Q, tile)            # T = dist_y @ Q     (B, N, N)
    partials = _sse_partials(Q, t, dist_x, tile)  # lane-dense partial SSE sums

    # Hierarchical final reduction + mean (nn.MSELoss mean over all elements).
    sse = jnp.sum(partials, dtype=jnp.float32)
    return sse / jnp.float32(B * N * N)


def _geodesic_loss_ref(Q, dist_x, dist_y):
    """Plain-JAX reference for correctness checking."""
    t = jnp.einsum("bij,bjk->bik", dist_y, Q)
    p = jnp.einsum("bji,bjk->bik", Q, t)  # Q^T @ t
    return jnp.mean((dist_x - p) ** 2)


if __name__ == "__main__":
    key = jax.random.PRNGKey(0)

    def make_inputs(B, N, key):
        kq, kx, ky = jax.random.split(key, 3)
        Q = jax.nn.softmax(
            jax.random.normal(kq, (B, N, N), dtype=jnp.float32), axis=-1
        )
        dist_x = jnp.abs(jax.random.normal(kx, (B, N, N), dtype=jnp.float32))
        dist_y = jnp.abs(jax.random.normal(ky, (B, N, N), dtype=jnp.float32))
        return Q, dist_x, dist_y

    # Small shape consistent with the module (real use is B x 2048 x 2048).
    k1, k2 = jax.random.split(key)
    Q, dx, dy = make_inputs(2, 128, k1)
    loss = jax.block_until_ready(geodesic_loss(Q, dx, dy))
    ref = jax.block_until_ready(_geodesic_loss_ref(Q, dx, dy))
    assert jnp.allclose(loss, ref, rtol=1e-4, atol=1e-4), (loss, ref)

    # Exercise multi-tile grid axes (i/j/k > 1) with a forced 128 tile.
    Q2, dx2, dy2 = make_inputs(1, 256, k2)
    loss2 = jax.block_until_ready(geodesic_loss(Q2, dx2, dy2, tile=128))
    ref2 = jax.block_until_ready(_geodesic_loss_ref(Q2, dx2, dy2))
    assert jnp.allclose(loss2, ref2, rtol=1e-4, atol=1e-4), (loss2, ref2)

    print("KERNEL_OK")
</pallas_src>

<mosaic_0001>
module attributes {stable_mosaic.version = 11 : i64} {
  func.func @_bmm_kernel(%arg0: i32, %arg1: i32, %arg2: i32, %arg3: i32, %arg4: memref<1x128x128xf32, #tpu.memory_space<vmem>>, %arg5: memref<1x128x128xf32, #tpu.memory_space<vmem>>, %arg6: memref<1x128x128xf32, #tpu.memory_space<vmem>>, %arg7: memref<128x128xf32, #tpu.memory_space<vmem>>) attributes {dimension_semantics = [#tpu.dimension_semantics<parallel>, #tpu.dimension_semantics<parallel>, #tpu.dimension_semantics<parallel>, #tpu.dimension_semantics<arbitrary>], iteration_bounds = array<i64: 2, 1, 1, 1>, scalar_prefetch = 0 : i64, scratch_operands = 1 : i64, tpu.core_type = #tpu.core_type<tc>, window_params = [{transform_indices = @transform_0, window_bounds = array<i64: 1, 128, 128>}, {transform_indices = @transform_1, window_bounds = array<i64: 1, 128, 128>}, {transform_indices = @transform_2, window_bounds = array<i64: 1, 128, 128>}]} {
    %c0_i32 = arith.constant 0 : i32
    %0 = arith.cmpi eq, %arg3, %c0_i32 : i32
    %1 = arith.extui %0 : i1 to i32
    %c0_i32_0 = arith.constant 0 : i32
    %2 = arith.cmpi ne, %1, %c0_i32_0 : i32
    scf.if %2 {
      %cst_12 = arith.constant 0.000000e+00 : f32
      %14 = vector.broadcast %cst_12 : f32 to vector<128x128xf32>
      %c0_13 = arith.constant 0 : index
      %c0_14 = arith.constant 0 : index
      %15 = vector.load %arg7[%c0_13, %c0_14] : memref<128x128xf32, #tpu.memory_space<vmem>>, vector<128x128xf32>
      tpu.vector_store %arg7[%c0_13, %c0_14], %14 {strides = array<i32>} : memref<128x128xf32, #tpu.memory_space<vmem>>, vector<128x128xf32>,
    } else {
    }
    %c0 = arith.constant 0 : index
    %c0_1 = arith.constant 0 : index
    %3 = vector.load %arg7[%c0, %c0_1] : memref<128x128xf32, #tpu.memory_space<vmem>>, vector<128x128xf32>
    %c0_2 = arith.constant 0 : index
    %c0_3 = arith.constant 0 : index
    %c0_4 = arith.constant 0 : index
    %4 = vector.load %arg4[%c0_2, %c0_3, %c0_4] : memref<1x128x128xf32, #tpu.memory_space<vmem>>, vector<1x128x128xf32>
    %5 = vector.shape_cast %4 : vector<1x128x128xf32> to vector<128x128xf32>
    %c0_5 = arith.constant 0 : index
    %c0_6 = arith.constant 0 : index
    %c0_7 = arith.constant 0 : index
    %6 = vector.load %arg5[%c0_5, %c0_6, %c0_7] : memref<1x128x128xf32, #tpu.memory_space<vmem>>, vector<1x128x128xf32>
    %7 = vector.shape_cast %6 : vector<1x128x128xf32> to vector<128x128xf32>
    %cst = arith.constant dense<0.000000e+00> : vector<128x128xf32>
    %8 = tpu.matmul %5, %7, %cst {dimension_numbers = #tpu.dot_dimension_numbers<[1], [0], [0], [1], [0, 0, 1, 1], [], []>} : vector<128x128xf32>, vector<128x128xf32>, vector<128x128xf32> -> vector<128x128xf32>
    %9 = arith.addf %3, %8 : vector<128x128xf32>
    %c0_8 = arith.constant 0 : index
    %c0_9 = arith.constant 0 : index
    %10 = vector.load %arg7[%c0_8, %c0_9] : memref<128x128xf32, #tpu.memory_space<vmem>>, vector<128x128xf32>
    tpu.vector_store %arg7[%c0_8, %c0_9], %9 {strides = array<i32>} : memref<128x128xf32, #tpu.memory_space<vmem>>, vector<128x128xf32>,
    %c0_i32_10 = arith.constant 0 : i32
    %11 = arith.cmpi eq, %arg3, %c0_i32_10 : i32
    %12 = arith.extui %11 : i1 to i32
    %c0_i32_11 = arith.constant 0 : i32
    %13 = arith.cmpi ne, %12, %c0_i32_11 : i32
    scf.if %13 {
      %c0_12 = arith.constant 0 : index
      %c0_13 = arith.constant 0 : index
      %14 = vector.load %arg7[%c0_12, %c0_13] : memref<128x128xf32, #tpu.memory_space<vmem>>, vector<128x128xf32>
      %c0_14 = arith.constant 0 : index
      %c0_15 = arith.constant 0 : index
      %c0_16 = arith.constant 0 : index
      %15 = vector.load %arg6[%c0_14, %c0_15, %c0_16] : memref<1x128x128xf32, #tpu.memory_space<vmem>>, vector<1x128x128xf32>
      %16 = vector.shape_cast %15 : vector<1x128x128xf32> to vector<128x128xf32>
      %17 = vector.shape_cast %14 : vector<128x128xf32> to vector<1x128x128xf32>
      tpu.vector_store %arg6[%c0_14, %c0_15, %c0_16], %17 {strides = array<i32>} : memref<1x128x128xf32, #tpu.memory_space<vmem>>, vector<1x128x128xf32>,
    } else {
    }
    return
  }
  func.func @transform_0(%arg0: i32, %arg1: i32, %arg2: i32, %arg3: i32) -> (i32, i32, i32) {
    %c0_i32 = arith.constant 0 : i32
    return %arg0, %arg1, %arg3 : i32, i32, i32
  }
  func.func @transform_1(%arg0: i32, %arg1: i32, %arg2: i32, %arg3: i32) -> (i32, i32, i32) {
    %c0_i32 = arith.constant 0 : i32
    return %arg0, %arg3, %arg2 : i32, i32, i32
  }
  func.func @transform_2(%arg0: i32, %arg1: i32, %arg2: i32, %arg3: i32) -> (i32, i32, i32) {
    %c0_i32 = arith.constant 0 : i32
    return %arg0, %arg1, %arg2 : i32, i32, i32
  }
}

</mosaic_0001>

<llo_original>
// kernel: tpu_custom_call.1
$region0: #{tpu_custom_call.1}
  #allocation0 [shape = 'u32[]', space=smem, size = 0x4, offset = 0x4, fixed_abs, tag = 'smem constant byte address 0x4 - core index']
  #allocation1 [shape = 'u32[144,128]{1,0:T(1,128)}', space=vmem, size = 0x12000, scoped, tag = 'internal scratch']
  #allocation2 [shape = 'f32[128,128]{1,0:T(8,128)}', space=vmem, size = 0x10000, scoped, tag = 'scratch operand']
  %s0 = inlined_call_operand.hbm [shape: f32[2,128,128], index: 0, kind: input, shape index: {}]
  %s1 = inlined_call_operand.hbm [shape: f32[2,128,128], index: 1, kind: input, shape index: {}]
  %s2 = inlined_call_operand.hbm [shape: f32[2,128,128], index: 2, kind: output, shape index: {}]
  %s3 = sld [smem:[#allocation0]]
  $region57: #{tpu_custom_call.1} parent=0
    _
  %s5 = ssub.s32 1, %s3
  %s6 = scalar_select 0, %s5, %s3
  $region1: #{tpu_custom_call.1} parent=0
    #allocation3 [shape = 'u8[131072]{0}', space=vmem, size = 0x20000, scoped, tag = 'input window, operand 0']
    #allocation4 [shape = 's32[2]{0}', space=sflag, size = 0x8, scoped, tag = 'scoped memory for tpu_custom_call.1']
    #allocation5 [shape = 's32[2]{0}', space=sflag, size = 0x8, scoped, tag = 'scoped memory for tpu_custom_call.1']
    #allocation6 [shape = 'u8[131072]{0}', space=vmem, size = 0x20000, scoped, tag = 'input window, operand 1']
    #allocation7 [shape = 's32[2]{0}', space=sflag, size = 0x8, scoped, tag = 'scoped memory for tpu_custom_call.1']
    #allocation8 [shape = 'u8[131072]{0}', space=vmem, size = 0x20000, scoped, tag = 'output window, operand 0']
    %7 = vsyncpa [#allocation4], 0
    %s8 = scalar_lea.sflag [#allocation4], 1
    %9 = vsyncpa %s8, 0
    %10 = vsyncpa [#allocation7], 0
    %s11 = scalar_lea.sflag [#allocation7], 1
    %12 = vsyncpa %s11, 0
    %13 = vsyncpa [#allocation5], 0
    %s14 = scalar_lea.sflag [#allocation5], 1
    %15 = vsyncpa %s14, 0
    loop: start=0, step=1, limit=4
    $region2: #{tpu_custom_call.1} parent=1 // loop_pre_header
      _
    $region3: #{tpu_custom_call.1} parent=1 // loop_header
      %s17 = sphi 0, %s21
      %p18 = scmp.ge.s32.totalorder %s17, 4
      %s24 = sphi 0, %s50
      %s25 = sphi 0, %s46
      %s26 = sphi 0, %s42
      %s27 = sphi 0, %s38
      %s28 = sphi 0, %s24
      %s29 = sphi 0, %s25
      %s30 = sphi 0, %s26
      %s31 = sphi 0, %s27
      %s32 = sphi 0, %s28
      %s33 = sphi 0, %s29
      %s34 = sphi 0, %s30
      %s35 = sphi 0, %s31
      %s57 = sphi 0, %s59
      %s60 = sphi 0, %s57
      %s61 = sphi 0, %s60
      %s77 = sphi 0, %s61
      %s87 = sphi 0, %s89
      %s90 = sphi 0, %s87
      %s91 = sphi 0, %s90
      %s107 = sphi 0, %s91
      %s117 = sphi 0, %s119
      %s120 = sphi 0, %s117
      %s121 = sphi 0, %s120
      %s137 = sphi 0, %s121
    $region4: #{tpu_custom_call.1} parent=1 // loop_header_branch
      %20 = sbr.rel (%p18) target = $region8
    $region5: #{tpu_custom_call.1} parent=1 // loop_body
      %s22 = ssub.s32 %s17, 1
      %s23 = ssub.s32 %s17, 2
      %s36 = sadd.s32 1, %s27
      %p37 = scmp.ge.s32.totalorder %s36, 1
      %s38 = scalar_select %p37, 0, %s36
      %s39 = sadd.s32 1, %s26
      %s40 = scalar_select %p37, %s39, %s26
      %p41 = scmp.ge.s32.totalorder %s40, 1
      %s42 = scalar_select %p41, 0, %s40
      %s43 = sadd.s32 1, %s25
      %s44 = scalar_select %p41, %s43, %s25
      %p45 = scmp.ge.s32.totalorder %s44, 1
      %s46 = scalar_select %p45, 0, %s44
      %s47 = sadd.s32 1, %s24
      %s48 = scalar_select %p45, %s47, %s24
      %p49 = scmp.ge.s32.totalorder %s48, 2
      %s50 = scalar_select %p49, 0, %s48
      %s51 = ssub.s32 %s24, %s50
      %s52 = ssub.s32 %s25, %s46
      %s53 = sor.u32 %s51, %s52
      %s54 = ssub.s32 %s27, %s38
      %s55 = sor.u32 %s53, %s54
      %p56 = scmp.eq.s32.totalorder %s55, 0
      %s58 = sadd.s32 %s57, 1
      %s59 = scalar_select %p56, %s57, %s58
      %p62 = pneg %p56
      %p63 = scmp.eq.s32.totalorder %s17, 1
      %p64 = por %p62, %p63
      %p65 = scmp.ne.s32.totalorder %s57, %s60
      %p66 = scmp.eq.s32.totalorder %s17, 0
      %p67 = por %p65, %p66
      %p68 = scmp.ne.s32.totalorder %s57, %s60
      %p69 = scmp.eq.s32.totalorder %s22, 1
      %p70 = por %p68, %p69
      %p71 = scmp.ne.s32.totalorder %s60, %s61
      %p72 = scmp.eq.s32.totalorder %s22, 0
      %p73 = por %p71, %p72
      %p74 = scmp.ne.s32.totalorder %s60, %s61
      %p75 = scmp.eq.s32.totalorder %s23, 1
      %p76 = por %p74, %p75
      %p78 = scmp.ne.s32.totalorder %s61, %s77
      %p79 = scmp.eq.s32.totalorder %s23, 0
      %p80 = por %p78, %p79
      %s81 = ssub.s32 %s24, %s50
      %s82 = ssub.s32 %s27, %s38
      %s83 = sor.u32 %s81, %s82
      %s84 = ssub.s32 %s26, %s42
      %s85 = sor.u32 %s83, %s84
      %p86 = scmp.eq.s32.totalorder %s85, 0
      %s88 = sadd.s32 %s87, 1
      %s89 = scalar_select %p86, %s87, %s88
      %p92 = pneg %p86
      %p93 = scmp.eq.s32.totalorder %s17, 1
      %p94 = por %p92, %p93
      %p95 = scmp.ne.s32.totalorder %s87, %s90
      %p96 = scmp.eq.s32.totalorder %s17, 0
      %p97 = por %p95, %p96
      %p98 = scmp.ne.s32.totalorder %s87, %s90
      %p99 = scmp.eq.s32.totalorder %s22, 1
      %p100 = por %p98, %p99
      %p101 = scmp.ne.s32.totalorder %s90, %s91
      %p102 = scmp.eq.s32.totalorder %s22, 0
      %p103 = por %p101, %p102
      %p104 = scmp.ne.s32.totalorder %s90, %s91
      %p105 = scmp.eq.s32.totalorder %s23, 1
      %p106 = por %p104, %p105
      %p108 = scmp.ne.s32.totalorder %s91, %s107
      %p109 = scmp.eq.s32.totalorder %s23, 0
      %p110 = por %p108, %p109
      %s111 = ssub.s32 %s24, %s50
      %s112 = ssub.s32 %s25, %s46
      %s113 = sor.u32 %s111, %s112
      %s114 = ssub.s32 %s26, %s42
      %s115 = sor.u32 %s113, %s114
      %p116 = scmp.eq.s32.totalorder %s115, 0
      %s118 = sadd.s32 %s117, 1
      %s119 = scalar_select %p116, %s117, %s118
      %p122 = pneg %p116
      %p123 = scmp.eq.s32.totalorder %s17, 1
      %p124 = por %p122, %p123
      %p125 = scmp.ne.s32.totalorder %s117, %s120
      %p126 = scmp.eq.s32.totalorder %s17, 0
      %p127 = por %p125, %p126
      %p128 = scmp.ne.s32.totalorder %s117, %s120
      %p129 = scmp.eq.s32.totalorder %s22, 1
      %p130 = por %p128, %p129
      %p131 = scmp.ne.s32.totalorder %s120, %s121
      %p132 = scmp.eq.s32.totalorder %s22, 0
      %p133 = por %p131, %p132
      %p134 = scmp.ne.s32.totalorder %s120, %s121
      %p135 = scmp.eq.s32.totalorder %s23, 1
      %p136 = por %p134, %p135
      %p138 = scmp.ne.s32.totalorder %s121, %s137
      %p139 = scmp.eq.s32.totalorder %s23, 0
      %p140 = por %p138, %p139
      %p141 = scmp.le.s32.totalorder 1, %s17
      %p142 = scmp.lt.s32.totalorder %s17, 3
      %p143 = pnand %p141, %p142
      %p144 = pneg %p143
      // Predicated region
      $region9: #{tpu_custom_call.1} parent=5 // pred_check
        _
      $region10: #{tpu_custom_call.1} parent=5 // pred_check_branch
        %146 = sbr.rel (%p143) target = $region12
      $region11: #{tpu_custom_call.1} parent=5 // pred_region
        %s147 = ssub.s32 %s17, 1
      $region12: #{tpu_custom_call.1} parent=5 // pred_fallthru
        _
      %p148 = scmp.lt.s32.totalorder %s17, 2
      // Predicated region
      $region13: #{tpu_custom_call.1} parent=5 // pred_check
        %p149 = pneg %p148
      $region14: #{tpu_custom_call.1} parent=5 // pred_check_branch
        %151 = sbr.rel (%p149) target = $region16
      $region15: #{tpu_custom_call.1} parent=5 // pred_region
        // Predicated region
        $region17: #{tpu_custom_call.1} parent=15 // pred_check
          %p152 = pneg %p67
        $region18: #{tpu_custom_call.1} parent=15 // pred_check_branch
          %154 = sbr.rel (%p152) target = $region20
        $region19: #{tpu_custom_call.1} parent=15 // pred_region
          %s155 = sand.u32 %s57, 1
          %s156 = scalar_lea.sflag [#allocation4], %s155
          %s157 = sand.u32 %s57, 1
          %s158 = smul.addr %s157, 128
          %s159 = scalar_lea.vmem [#allocation3], %s158
          %s160 = smul.u32 16, %s25
          %s162 = ssub.s32 2048, 2048
          %163 = vsyncadd %s156, %s162
          %s164 = sadd.s32 %s27, %s160
          %s165 = smul.addr %s24, 16
          %s166 = sadd.s32 %s164, %s165
          %s167 = smul.addr %s166, 128
          %s168 = scalar_lea.hbm %s0, %s167
          %s169 = sshll.u32 %s159, 4
          %s170 = int_to_ptr.vmem [resolvable:$true] %s169
          %175 = dma.hbm_to_vmem [thread:$0]  %s168, 2048, %s170, %s156, 128, 128, 8
        $region20: #{tpu_custom_call.1} parent=15 // pred_fallthru
          _
        // Predicated region
        $region21: #{tpu_custom_call.1} parent=15 // pred_check
          %p176 = pneg %p97
        $region22: #{tpu_custom_call.1} parent=15 // pred_check_branch
          %178 = sbr.rel (%p176) target = $region24
        $region23: #{tpu_custom_call.1} parent=15 // pred_region
          %s179 = sand.u32 %s87, 1
          %s180 = scalar_lea.sflag [#allocation7], %s179
          %s181 = sand.u32 %s87, 1
          %s182 = smul.addr %s181, 128
          %s183 = scalar_lea.vmem [#allocation6], %s182
          %s184 = smul.u32 16, %s27
          %s186 = ssub.s32 2048, 2048
          %187 = vsyncadd %s180, %s186
          %s188 = sadd.s32 %s26, %s184
          %s189 = smul.addr %s24, 16
          %s190 = sadd.s32 %s188, %s189
          %s191 = smul.addr %s190, 128
          %s192 = scalar_lea.hbm %s1, %s191
          %s193 = sshll.u32 %s183, 4
          %s194 = int_to_ptr.vmem [resolvable:$true] %s193
          %199 = dma.hbm_to_vmem [thread:$0]  %s192, 2048, %s194, %s180, 128, 128, 8
        $region24: #{tpu_custom_call.1} parent=15 // pred_fallthru
          _
      $region16: #{tpu_custom_call.1} parent=5 // pred_fallthru
        _
      %p200 = scmp.le.s32.totalorder 1, %s17
      %p201 = scmp.lt.s32.totalorder %s17, 3
      %p202 = pnand %p200, %p201
      %p203 = pneg %p202
      // Predicated region
      $region25: #{tpu_custom_call.1} parent=5 // pred_check
        _
      $region26: #{tpu_custom_call.1} parent=5 // pred_check_branch
        %205 = sbr.rel (%p202) target = $region28
      $region27: #{tpu_custom_call.1} parent=5 // pred_region
        %s206 = ssub.s32 %s17, 1
        %s207 = sand.u32 %s60, 1
        %s208 = scalar_lea.sflag [#allocation4], %s207
        %s209 = sand.u32 %s60, 1
        %s210 = smul.addr %s209, 128
        %s211 = scalar_lea.vmem [#allocation3], %s210
        // Predicated region
        $region29: #{tpu_custom_call.1} parent=27 // pred_check
          %p212 = pneg %p73
        $region30: #{tpu_custom_call.1} parent=27 // pred_check_branch
          %214 = sbr.rel (%p212) target = $region32
        $region31: #{tpu_custom_call.1} parent=27 // pred_region
          %215 = dma.done %s208, 2048
        $region32: #{tpu_custom_call.1} parent=27 // pred_fallthru
          _
        %s216 = sand.u32 %s90, 1
        %s217 = scalar_lea.sflag [#allocation7], %s216
        %s218 = sand.u32 %s90, 1
        %s219 = smul.addr %s218, 128
        %s220 = scalar_lea.vmem [#allocation6], %s219
        // Predicated region
        $region33: #{tpu_custom_call.1} parent=27 // pred_check
          %p221 = pneg %p103
        $region34: #{tpu_custom_call.1} parent=27 // pred_check_branch
          %223 = sbr.rel (%p221) target = $region36
        $region35: #{tpu_custom_call.1} parent=27 // pred_region
          %224 = dma.done %s217, 2048
        $region36: #{tpu_custom_call.1} parent=27 // pred_fallthru
          _
        %s225 = sand.u32 %s60, 1
        %s226 = scalar_lea.sflag [#allocation4], %s225
        %s227 = sand.u32 %s60, 1
        %s228 = smul.addr %s227, 128
        %s229 = scalar_lea.vmem [#allocation3], %s228
        %p230 = pneg %p73
        %p231 = pneg %p70
        %s232 = sand.u32 %s90, 1
        %s233 = scalar_lea.sflag [#allocation7], %s232
        %s234 = sand.u32 %s90, 1
        %s235 = smul.addr %s234, 128
        %s236 = scalar_lea.vmem [#allocation6], %s235
        %p237 = pneg %p103
        %p238 = pneg %p100
        %p239 = pneg %p133
        %p240 = pneg %p130
        %s241 = sand.u32 %s120, 1
        %s242 = scalar_lea.sflag [#allocation5], %s241
        %s243 = sand.u32 %s120, 1
        %s244 = smul.addr %s243, 128
        %s245 = scalar_lea.vmem [#allocation8], %s244
        %s246 = smul.u32 16, %s29
        %s247 = smul.u32 16, %s31
        %s248 = smul.u32 16, %s29
        %p249 = scmp.eq.s32.totalorder %s31, 0
        // Predicated region
        $region37: #{tpu_custom_call.1} parent=27 // pred_check
          %p250 = pneg %p249
        $region38: #{tpu_custom_call.1} parent=27 // pred_check_branch
          %252 = sbr.rel (%p250) target = $region40
        $region39: #{tpu_custom_call.1} parent=27 // pred_region
          %253 = vst [vmem:[#allocation2] sm:$0xff] 0.0
          %254 = vst [vmem:[#allocation2 + $0x8] sm:$0xff] 0.0
          %255 = vst [vmem:[#allocation2 + $0x10] sm:$0xff] 0.0
          %256 = vst [vmem:[#allocation2 + $0x18] sm:$0xff] 0.0
          %257 = vst [vmem:[#allocation2 + $0x20] sm:$0xff] 0.0
          %258 = vst [vmem:[#allocation2 + $0x28] sm:$0xff] 0.0
          %259 = vst [vmem:[#allocation2 + $0x30] sm:$0xff] 0.0
          %260 = vst [vmem:[#allocation2 + $0x38] sm:$0xff] 0.0
          %261 = vst [vmem:[#allocation2 + $0x40] sm:$0xff] 0.0
          %262 = vst [vmem:[#allocation2 + $0x48] sm:$0xff] 0.0
          %263 = vst [vmem:[#allocation2 + $0x50] sm:$0xff] 0.0
          %264 = vst [vmem:[#allocation2 + $0x58] sm:$0xff] 0.0
          %265 = vst [vmem:[#allocation2 + $0x60] sm:$0xff] 0.0
          %266 = vst [vmem:[#allocation2 + $0x68] sm:$0xff] 0.0
          %267 = vst [vmem:[#allocation2 + $0x70] sm:$0xff] 0.0
          %268 = vst [vmem:[#allocation2 + $0x78] sm:$0xff] 0.0
        $region40: #{tpu_custom_call.1} parent=27 // pred_fallthru
          _
        %v269 = vld [vmem:[#allocation2] sm:$0xff]
        %v270 = vld [vmem:[#allocation2 + $0x8] sm:$0xff]
        %v271 = vld [vmem:[#allocation2 + $0x10] sm:$0xff]
        %v272 = vld [vmem:[#allocation2 + $0x18] sm:$0xff]
        %v273 = vld [vmem:[#allocation2 + $0x20] sm:$0xff]
        %v274 = vld [vmem:[#allocation2 + $0x28] sm:$0xff]
        %v275 = vld [vmem:[#allocation2 + $0x30] sm:$0xff]
        %v276 = vld [vmem:[#allocation2 + $0x38] sm:$0xff]
        %v277 = vld [vmem:[#allocation2 + $0x40] sm:$0xff]
        %v278 = vld [vmem:[#allocation2 + $0x48] sm:$0xff]
        %v279 = vld [vmem:[#allocation2 + $0x50] sm:$0xff]
        %v280 = vld [vmem:[#allocation2 + $0x58] sm:$0xff]
        %v281 = vld [vmem:[#allocation2 + $0x60] sm:$0xff]
        %v282 = vld [vmem:[#allocation2 + $0x68] sm:$0xff]
        %v283 = vld [vmem:[#allocation2 + $0x70] sm:$0xff]
        %v284 = vld [vmem:[#allocation2 + $0x78] sm:$0xff]
        %v285 = vld [vmem:[%s211] sm:$0xff]
        %v286 = vld [vmem:[%s211 + $0x8] sm:$0xff]
        %v287 = vld [vmem:[%s211 + $0x10] sm:$0xff]
        %v288 = vld [vmem:[%s211 + $0x18] sm:$0xff]
        %v289 = vld [vmem:[%s211 + $0x20] sm:$0xff]
        %v290 = vld [vmem:[%s211 + $0x28] sm:$0xff]
        %v291 = vld [vmem:[%s211 + $0x30] sm:$0xff]
        %v292 = vld [vmem:[%s211 + $0x38] sm:$0xff]
        %v293 = vld [vmem:[%s211 + $0x40] sm:$0xff]
        %v294 = vld [vmem:[%s211 + $0x48] sm:$0xff]
        %v295 = vld [vmem:[%s211 + $0x50] sm:$0xff]
        %v296 = vld [vmem:[%s211 + $0x58] sm:$0xff]
        %v297 = vld [vmem:[%s211 + $0x60] sm:$0xff]
        %v298 = vld [vmem:[%s211 + $0x68] sm:$0xff]
        %v299 = vld [vmem:[%s211 + $0x70] sm:$0xff]
        %v300 = vld [vmem:[%s211 + $0x78] sm:$0xff]
        %v301 = vld [vmem:[%s220] sm:$0xff]
        %v302 = vld [vmem:[%s220 + $0x8] sm:$0xff]
        %v303 = vld [vmem:[%s220 + $0x10] sm:$0xff]
        %v304 = vld [vmem:[%s220 + $0x18] sm:$0xff]
        %v305 = vld [vmem:[%s220 + $0x20] sm:$0xff]
        %v306 = vld [vmem:[%s220 + $0x28] sm:$0xff]
        %v307 = vld [vmem:[%s220 + $0x30] sm:$0xff]
        %v308 = vld [vmem:[%s220 + $0x38] sm:$0xff]
        %v309 = vld [vmem:[%s220 + $0x40] sm:$0xff]
        %v310 = vld [vmem:[%s220 + $0x48] sm:$0xff]
        %v311 = vld [vmem:[%s220 + $0x50] sm:$0xff]
        %v312 = vld [vmem:[%s220 + $0x58] sm:$0xff]
        %v313 = vld [vmem:[%s220 + $0x60] sm:$0xff]
        %v314 = vld [vmem:[%s220 + $0x68] sm:$0xff]
        %v315 = vld [vmem:[%s220 + $0x70] sm:$0xff]
        %v316 = vld [vmem:[%s220 + $0x78] sm:$0xff]
        %317 = vmatprep.subr.mxu0 0.0
        %318 = vmatpush1.msra.mxu0 %v301
        %319 = vmatprep.subr.mxu0 0.0
        %320 = vmatpush1.msra.mxu0 %v302
        %321 = vmatprep.subr.mxu0 0.0
        %322 = vmatpush1.msra.mxu0 %v303
        %323 = vmatprep.subr.mxu0 0.0
        %324 = vmatpush1.msra.mxu0 %v304
        %325 = vmatprep.subr.mxu0 0.0
        %326 = vmatpush1.msra.mxu0 %v305
        %327 = vmatprep.subr.mxu0 0.0
        %328 = vmatpush1.msra.mxu0 %v306
        %329 = vmatprep.subr.mxu0 0.0
        %330 = vmatpush1.msra.mxu0 %v307
        %331 = vmatprep.subr.mxu0 0.0
        %332 = vmatpush1.msra.mxu0 %v308
        %333 = vmatprep.subr.mxu0 0.0
        %334 = vmatpush1.msra.mxu0 %v309
        %335 = vmatprep.subr.mxu0 0.0
        %336 = vmatpush1.msra.mxu0 %v310
        %337 = vmatprep.subr.mxu0 0.0
        %338 = vmatpush1.msra.mxu0 %v311
        %339 = vmatprep.subr.mxu0 0.0
        %340 = vmatpush1.msra.mxu0 %v312
        %341 = vmatprep.subr.mxu0 0.0
        %342 = vmatpush1.msra.mxu0 %v313
        %343 = vmatprep.subr.mxu0 0.0
        %344 = vmatpush1.msra.mxu0 %v314
        %345 = vmatprep.subr.mxu0 0.0
        %346 = vmatpush1.msra.mxu0 %v315
        %347 = vmatprep.subr.mxu0 0.0
        %348 = vmatpush1.msra.mxu0 %v316
        %349 = vmatprep.subr.mxu0 0.0
        %350 = vmatpush1.msra.mxu0 0.0
        %351 = vmatprep.subr.mxu0 0.0
        %352 = vmatpush1.msra.mxu0 0.0
        %353 = vmatprep.subr.mxu0 0.0
        %354 = vmatpush1.msra.mxu0 0.0
        %355 = vmatprep.subr.mxu0 0.0
        %356 = vmatpush1.msra.mxu0 0.0
        %357 = vmatprep.subr.mxu0 0.0
        %358 = vmatpush1.msra.mxu0 0.0
        %359 = vmatprep.subr.mxu0 0.0
        %360 = vmatpush1.msra.mxu0 0.0
        %361 = vmatprep.subr.mxu0 0.0
        %362 = vmatpush1.msra.mxu0 0.0
        %363 = vmatprep.subr.mxu0 0.0
        %364 = vmatpush1.msra.mxu0 0.0
        %365 = vmatprep.subr.mxu0 0.0
        %366 = vmatpush1.msra.mxu0 0.0
        %367 = vmatprep.subr.mxu0 0.0
        %368 = vmatpush1.msra.mxu0 0.0
        %369 = vmatprep.subr.mxu0 0.0
        %370 = vmatpush1.msra.mxu0 0.0
        %371 = vmatprep.subr.mxu0 0.0
        %372 = vmatpush1.msra.mxu0 0.0
        %373 = vmatprep.subr.mxu0 0.0
        %374 = vmatpush1.msra.mxu0 0.0
        %375 = vmatprep.subr.mxu0 0.0
        %376 = vmatpush1.msra.mxu0 0.0
        %377 = vmatprep.subr.mxu0 0.0
        %378 = vmatpush1.msra.mxu0 0.0
        %379 = vmatprep.subr.mxu0 0.0
        %380 = vmatpush1.msra.mxu0 0.0
        %381 = vmatprep.mubr.f32.mxu0 0.0
        %382 = vmatmul.mubr.f32.gmra.mrb[0].mxu0 %v285
        %v383 = vpop.f32.mrb[0].mxu0
        %v384 = vadd.f32 0.0, %v383
        %v385 = vpop.f32.mrb[0].mxu0
        %386 = vmatprep.mubr.f32.mxu0 0.0
        %387 = vmatmul.mubr.f32.gmra.mrb[0].mxu0 %v286
        %v388 = vpop.f32.mrb[0].mxu0
        %v389 = vadd.f32 0.0, %v388
        %v390 = vpop.f32.mrb[0].mxu0
        %391 = vmatprep.mubr.f32.mxu0 0.0
        %392 = vmatmul.mubr.f32.gmra.mrb[0].mxu0 %v287
        %v393 = vpop.f32.mrb[0].mxu0
        %v394 = vadd.f32 0.0, %v393
        %v395 = vpop.f32.mrb[0].mxu0
        %396 = vmatprep.mubr.f32.mxu0 0.0
        %397 = vmatmul.mubr.f32.gmra.mrb[0].mxu0 %v288
        %v398 = vpop.f32.mrb[0].mxu0
        %v399 = vadd.f32 0.0, %v398
        %v400 = vpop.f32.mrb[0].mxu0
        %401 = vmatprep.mubr.f32.mxu0 0.0
        %402 = vmatmul.mubr.f32.gmra.mrb[0].mxu0 %v289
        %v403 = vpop.f32.mrb[0].mxu0
        %v404 = vadd.f32 0.0, %v403
        %v405 = vpop.f32.mrb[0].mxu0
        %406 = vmatprep.mubr.f32.mxu0 0.0
        %407 = vmatmul.mubr.f32.gmra.mrb[0].mxu0 %v290
        %v408 = vpop.f32.mrb[0].mxu0
        %v409 = vadd.f32 0.0, %v408
        %v410 = vpop.f32.mrb[0].mxu0
        %411 = vmatprep.mubr.f32.mxu0 0.0
        %412 = vmatmul.mubr.f32.gmra.mrb[0].mxu0 %v291
        %v413 = vpop.f32.mrb[0].mxu0
        %v414 = vadd.f32 0.0, %v413
        %v415 = vpop.f32.mrb[0].mxu0
        %416 = vmatprep.mubr.f32.mxu0 0.0
        %417 = vmatmul.mubr.f32.gmra.mrb[0].mxu0 %v292
        %v418 = vpop.f32.mrb[0].mxu0
        %v419 = vadd.f32 0.0, %v418
        %v420 = vpop.f32.mrb[0].mxu0
        %421 = vmatprep.mubr.f32.mxu0 0.0
        %422 = vmatmul.mubr.f32.gmra.mrb[0].mxu0 %v293
        %v423 = vpop.f32.mrb[0].mxu0
        %v424 = vadd.f32 0.0, %v423
        %v425 = vpop.f32.mrb[0].mxu0
        %426 = vmatprep.mubr.f32.mxu0 0.0
        %427 = vmatmul.mubr.f32.gmra.mrb[0].mxu0 %v294
        %v428 = vpop.f32.mrb[0].mxu0
        %v429 = vadd.f32 0.0, %v428
        %v430 = vpop.f32.mrb[0].mxu0
        %431 = vmatprep.mubr.f32.mxu0 0.0
        %432 = vmatmul.mubr.f32.gmra.mrb[0].mxu0 %v295
        %v433 = vpop.f32.mrb[0].mxu0
        %v434 = vadd.f32 0.0, %v433
        %v435 = vpop.f32.mrb[0].mxu0
        %436 = vmatprep.mubr.f32.mxu0 0.0
        %437 = vmatmul.mubr.f32.gmra.mrb[0].mxu0 %v296
        %v438 = vpop.f32.mrb[0].mxu0
        %v439 = vadd.f32 0.0, %v438
        %v440 = vpop.f32.mrb[0].mxu0
        %441 = vmatprep.mubr.f32.mxu0 0.0
        %442 = vmatmul.mubr.f32.gmra.mrb[0].mxu0 %v297
        %v443 = vpop.f32.mrb[0].mxu0
        %v444 = vadd.f32 0.0, %v443
        %v445 = vpop.f32.mrb[0].mxu0
        %446 = vmatprep.mubr.f32.mxu0 0.0
        %447 = vmatmul.mubr.f32.gmra.mrb[0].mxu0 %v298
        %v448 = vpop.f32.mrb[0].mxu0
        %v449 = vadd.f32 0.0, %v448
        %v450 = vpop.f32.mrb[0].mxu0
        %451 = vmatprep.mubr.f32.mxu0 0.0
        %452 = vmatmul.mubr.f32.gmra.mrb[0].mxu0 %v299
        %v453 = vpop.f32.mrb[0].mxu0
        %v454 = vadd.f32 0.0, %v453
        %v455 = vpop.f32.mrb[0].mxu0
        %456 = vmatprep.mubr.f32.mxu0 0.0
        %457 = vmatmul.mubr.f32.gmra.mrb[0].mxu0 %v300
        %v458 = vpop.f32.mrb[0].mxu0
        %v459 = vadd.f32 0.0, %v458
        %v460 = vpop.f32.mrb[0].mxu0
        %461 = vdwg.mxu0
        %v462 = vadd.f32 %v269, %v384
        %v463 = vadd.f32 %v270, %v389
        %v464 = vadd.f32 %v271, %v394
        %v465 = vadd.f32 %v272, %v399
        %v466 = vadd.f32 %v273, %v404
        %v467 = vadd.f32 %v274, %v409
        %v468 = vadd.f32 %v275, %v414
        %v469 = vadd.f32 %v276, %v419
        %v470 = vadd.f32 %v277, %v424
        %v471 = vadd.f32 %v278, %v429
        %v472 = vadd.f32 %v279, %v434
        %v473 = vadd.f32 %v280, %v439
        %v474 = vadd.f32 %v281, %v444
        %v475 = vadd.f32 %v282, %v449
        %v476 = vadd.f32 %v283, %v454
        %v477 = vadd.f32 %v284, %v459
        %478 = vst [vmem:[#allocation2] sm:$0xff] %v462
        %479 = vst [vmem:[#allocation2 + $0x8] sm:$0xff] %v463
        %480 = vst [vmem:[#allocation2 + $0x10] sm:$0xff] %v464
        %481 = vst [vmem:[#allocation2 + $0x18] sm:$0xff] %v465
        %482 = vst [vmem:[#allocation2 + $0x20] sm:$0xff] %v466
        %483 = vst [vmem:[#allocation2 + $0x28] sm:$0xff] %v467
        %484 = vst [vmem:[#allocation2 + $0x30] sm:$0xff] %v468
        %485 = vst [vmem:[#allocation2 + $0x38] sm:$0xff] %v469
        %486 = vst [vmem:[#allocation2 + $0x40] sm:$0xff] %v470
        %487 = vst [vmem:[#allocation2 + $0x48] sm:$0xff] %v471
        %488 = vst [vmem:[#allocation2 + $0x50] sm:$0xff] %v472
        %489 = vst [vmem:[#allocation2 + $0x58] sm:$0xff] %v473
        %490 = vst [vmem:[#allocation2 + $0x60] sm:$0xff] %v474
        %491 = vst [vmem:[#allocation2 + $0x68] sm:$0xff] %v475
        %492 = vst [vmem:[#allocation2 + $0x70] sm:$0xff] %v476
        %493 = vst [vmem:[#allocation2 + $0x78] sm:$0xff] %v477
        // Predicated region
        $region41: #{tpu_custom_call.1} parent=27 // pred_check
          %p494 = pneg %p249
        $region42: #{tpu_custom_call.1} parent=27 // pred_check_branch
          %496 = sbr.rel (%p494) target = $region44
        $region43: #{tpu_custom_call.1} parent=27 // pred_region
          %v497 = vld [vmem:[#allocation2] sm:$0xff]
          %v498 = vld [vmem:[#allocation2 + $0x8] sm:$0xff]
          %v499 = vld [vmem:[#allocation2 + $0x10] sm:$0xff]
          %v500 = vld [vmem:[#allocation2 + $0x18] sm:$0xff]
          %v501 = vld [vmem:[#allocation2 + $0x20] sm:$0xff]
          %v502 = vld [vmem:[#allocation2 + $0x28] sm:$0xff]
          %v503 = vld [vmem:[#allocation2 + $0x30] sm:$0xff]
          %v504 = vld [vmem:[#allocation2 + $0x38] sm:$0xff]
          %v505 = vld [vmem:[#allocation2 + $0x40] sm:$0xff]
          %v506 = vld [vmem:[#allocation2 + $0x48] sm:$0xff]
          %v507 = vld [vmem:[#allocation2 + $0x50] sm:$0xff]
          %v508 = vld [vmem:[#allocation2 + $0x58] sm:$0xff]
          %v509 = vld [vmem:[#allocation2 + $0x60] sm:$0xff]
          %v510 = vld [vmem:[#allocation2 + $0x68] sm:$0xff]
          %v511 = vld [vmem:[#allocation2 + $0x70] sm:$0xff]
          %v512 = vld [vmem:[#allocation2 + $0x78] sm:$0xff]
          %513 = vst [vmem:[%s245] sm:$0xff] %v497
          %514 = vst [vmem:[%s245 + $0x8] sm:$0xff] %v498
          %515 = vst [vmem:[%s245 + $0x10] sm:$0xff] %v499
          %516 = vst [vmem:[%s245 + $0x18] sm:$0xff] %v500
          %517 = vst [vmem:[%s245 + $0x20] sm:$0xff] %v501
          %518 = vst [vmem:[%s245 + $0x28] sm:$0xff] %v502
          %519 = vst [vmem:[%s245 + $0x30] sm:$0xff] %v503
          %520 = vst [vmem:[%s245 + $0x38] sm:$0xff] %v504
          %521 = vst [vmem:[%s245 + $0x40] sm:$0xff] %v505
          %522 = vst [vmem:[%s245 + $0x48] sm:$0xff] %v506
          %523 = vst [vmem:[%s245 + $0x50] sm:$0xff] %v507
          %524 = vst [vmem:[%s245 + $0x58] sm:$0xff] %v508
          %525 = vst [vmem:[%s245 + $0x60] sm:$0xff] %v509
          %526 = vst [vmem:[%s245 + $0x68] sm:$0xff] %v510
          %527 = vst [vmem:[%s245 + $0x70] sm:$0xff] %v511
          %528 = vst [vmem:[%s245 + $0x78] sm:$0xff] %v512
        $region44: #{tpu_custom_call.1} parent=27 // pred_fallthru
          _
        %s529 = sand.u32 %s120, 1
        %s530 = scalar_lea.sflag [#allocation5], %s529
        %s531 = sand.u32 %s120, 1
        %s532 = smul.addr %s531, 128
        %s533 = scalar_lea.vmem [#allocation8], %s532
        // Predicated region
        $region45: #{tpu_custom_call.1} parent=27 // pred_check
          %p534 = pneg %p130
        $region46: #{tpu_custom_call.1} parent=27 // pred_check_branch
          %536 = sbr.rel (%p534) target = $region48
        $region47: #{tpu_custom_call.1} parent=27 // pred_region
          %s537 = smul.u32 16, %s29
          %s539 = ssub.s32 2048, 2048
          %540 = vsyncadd %s530, %s539
          %s541 = sadd.s32 %s30, %s537
          %s542 = smul.addr %s28, 16
          %s543 = sadd.s32 %s541, %s542
          %s544 = smul.addr %s543, 128
          %s545 = scalar_lea.hbm %s2, %s544
          %s546 = sshll.u32 %s533, 4
          %s547 = int_to_ptr.vmem [resolvable:$true] %s546
          %552 = dma.vmem_to_hbm [thread:$0]  %s547, 2048, %s545, %s530, 128, 128, 8
        $region48: #{tpu_custom_call.1} parent=27 // pred_fallthru
          _
      $region28: #{tpu_custom_call.1} parent=5 // pred_fallthru
        _
      %p553 = scmp.le.s32.totalorder 2, %s17
      // Predicated region
      $region49: #{tpu_custom_call.1} parent=5 // pred_check
        %p554 = pneg %p553
      $region50: #{tpu_custom_call.1} parent=5 // pred_check_branch
        %556 = sbr.rel (%p554) target = $region52
      $region51: #{tpu_custom_call.1} parent=5 // pred_region
        %s557 = ssub.s32 %s17, 2
        // Predicated region
        $region53: #{tpu_custom_call.1} parent=51 // pred_check
          %p558 = pneg %p136
        $region54: #{tpu_custom_call.1} parent=51 // pred_check_branch
          %560 = sbr.rel (%p558) target = $region56
        $region55: #{tpu_custom_call.1} parent=51 // pred_region
          %s561 = sand.u32 %s121, 1
          %s562 = scalar_lea.sflag [#allocation5], %s561
          %s563 = sand.u32 %s121, 1
          %s564 = smul.addr %s563, 128
          %s565 = scalar_lea.vmem [#allocation8], %s564
          %566 = dma.done %s562, 2048
        $region56: #{tpu_custom_call.1} parent=51 // pred_fallthru
          _
      $region52: #{tpu_custom_call.1} parent=5 // pred_fallthru
        _
    $region6: #{tpu_custom_call.1} parent=1 // loop_footer
      %s21 = sadd.s32 1, %s17
    $region7: #{tpu_custom_call.1} parent=1 // loop_footer_branch
      %16 = sbr.rel target = $region3
    $region8: #{tpu_custom_call.1} parent=1 // loop_exit
      _
    %567 = vsyncpa [#allocation4], 1
    %s568 = scalar_lea.sflag [#allocation4], 1
    %569 = vsyncpa %s568, 1
    %570 = vsyncpa [#allocation7], 1
    %s571 = scalar_lea.sflag [#allocation7], 1
    %572 = vsyncpa %s571, 1
    %573 = vsyncpa [#allocation5], 1
    %s574 = scalar_lea.sflag [#allocation5], 1
    %575 = vsyncpa %s574, 1

</llo_original>
